<compile_context>
chip_gen: v5e
topology: v5e:2x2
jax: 0.10.0
libtpu: 0.0.40
codegen_flags: <defaults>
</compile_context>

<pallas_src>
import functools

import jax
import jax.numpy as jnp
from jax.experimental import pallas as pl
from jax.experimental.pallas import tpu as pltpu

_HIDDEN = 64            # MLP hidden width (module default hidden_features=(64, 64))
_SMALL_BATCH_MAX = 1024  # below this: single-block, gridless (latency-bound regime)
_MIN_TILE = 1024        # grid-path tiles never shrink below this


# ----------------------------- Pallas kernel -------------------------------


def _fused_mlp_kernel(x_ref, w1_ref, b1_ref, w2_ref, b2_ref, w3_ref, b3_ref,
                      std_ref, out_ref):
    """All heads fused: 3 lane-dense bf16 matmuls (f32 acc) + tanh + std add."""
    x = x_ref[...].astype(jnp.bfloat16)
    h = jnp.tanh(
        jnp.dot(x, w1_ref[...], preferred_element_type=jnp.float32)
        + b1_ref[...])
    h = jnp.tanh(
        jnp.dot(h.astype(jnp.bfloat16), w2_ref[...],
                preferred_element_type=jnp.float32)
        + b2_ref[...])
    y = (jnp.dot(h.astype(jnp.bfloat16), w3_ref[...],
                 preferred_element_type=jnp.float32)
         + b3_ref[...])
    # std slot: W3/b3 columns are zero there, std_ref is 0 elsewhere, so adding
    # std_ref writes exp(logstd) only into the std columns.
    out_ref[...] = (y + std_ref[...]).astype(out_ref.dtype)


def _fused_forward(x, packed, std_add, *, batch_tile=4096):
    """Run the fused kernel; gridless for small batches, batch-tiled otherwise."""
    w1, b1, w2, b2, w3, b3 = packed
    batch, feat = x.shape
    h64 = w1.shape[1]
    padded = w3.shape[1]
    out_dtype = jnp.bfloat16  # halves the slab writeback; wrapper re-casts slices

    weight_bytes = 2 * (feat * h64 + h64 * h64 + h64 * padded)  # bf16
    bias_bytes = 4 * (2 * h64 + 2 * padded)                     # f32 biases + std_add

    def cost(nrows):
        flops = 2 * nrows * (feat * h64 + h64 * h64 + h64 * padded)
        transcendentals = nrows * 2 * h64  # tanh (exp(logstd) is precomputed)
        bytes_accessed = (4 * nrows * feat + 2 * nrows * padded
                          + weight_bytes + bias_bytes)
        return pl.CostEstimate(flops=flops, transcendentals=transcendentals,
                               bytes_accessed=bytes_accessed)

    args = (x, w1, b1, w2, b2, w3, b3, std_add)

    if batch <= _SMALL_BATCH_MAX:
        # Everything fits comfortably in VMEM: single block, no grid machinery.
        vmem = pl.BlockSpec(memory_space=pltpu.MemorySpace.VMEM)
        return pl.pallas_call(
            _fused_mlp_kernel,
            out_shape=jax.ShapeDtypeStruct((batch, padded), out_dtype),
            in_specs=[vmem] * len(args),
            out_specs=vmem,
            cost_estimate=cost(batch),
        )(*args)

    # Large-batch path: stream big activation tiles, keep weights resident.
    tb = max(_MIN_TILE, int(batch_tile))
    # Keep >= 4 grid steps so v7x's 2 TensorCores both get work (parallel axis).
    while tb > _MIN_TILE and pl.cdiv(batch, tb) < 4:
        tb //= 2
    grid = (pl.cdiv(batch, tb),)  # ragged last block is masked by Pallas: no pad/slice pass

    def full(a):
        zeros = (0,) * a.ndim
        return pl.BlockSpec(a.shape, lambda i, z=zeros: z)

    # VMEM budget: double-buffered x/out tiles + resident weights + f32 matmul
    # intermediates + headroom.  Only raise the scoped limit if it would not fit
    # the 16 MiB default (v5e).
    vmem_needed = (2 * tb * (4 * feat + 2 * padded)
                   + weight_bytes + bias_bytes
                   + 3 * 4 * tb * h64
                   + (2 << 20))
    cp = pltpu.CompilerParams(
        dimension_semantics=("parallel",),
        vmem_limit_bytes=int(vmem_needed) if vmem_needed > (16 << 20) else None,
    )

    return pl.pallas_call(
        _fused_mlp_kernel,
        out_shape=jax.ShapeDtypeStruct((batch, padded), out_dtype),
        grid=grid,
        in_specs=[pl.BlockSpec((tb, feat), lambda i: (i, 0)),
                  full(w1), full(b1), full(w2), full(b2), full(w3), full(b3),
                  full(std_add)],
        out_specs=pl.BlockSpec((tb, padded), lambda i: (i, 0)),
        compiler_params=cp,
        cost_estimate=cost(batch),
    )(*args)


# ------------------------- parameter initialization ------------------------


def _orthogonal(key, shape, dtype=jnp.float32):
    """Deterministic orthogonal init (matches nn.init.orthogonal_ semantics)."""
    rows, cols = shape
    n, m = max(rows, cols), min(rows, cols)
    a = jax.random.normal(key, (n, m), dtype=jnp.float32)
    q, r = jnp.linalg.qr(a)
    q = q * jnp.sign(jnp.diagonal(r))[None, :]
    if rows < cols:
        q = q.T
    return q[:rows, :cols].astype(dtype)


def init_mlp_params(key, in_features, out_features, hidden=(_HIDDEN, _HIDDEN)):
    """Orthogonal weights, zero biases; weights stored as (in, out)."""
    dims = (in_features,) + tuple(hidden) + (out_features,)
    params = []
    for nin, nout in zip(dims[:-1], dims[1:]):
        key, sub = jax.random.split(key)
        params.append(_orthogonal(sub, (nin, nout)))
        params.append(jnp.zeros((1, nout), jnp.float32))  # bias kept 2-D for TPU
    return tuple(params)


class MuJoCoModelPallas:
    """JAX/Pallas port of derl MuJoCoModel (all heads fused into one kernel)."""

    def __init__(self, input_shape, output_units, seed=0, batch_tile=4096):
        if not isinstance(output_units, (tuple, list)):
            output_units = [output_units]
        self.output_units = tuple(int(n) for n in output_units)
        self.in_features = int(functools.reduce(lambda a, b: a * b,
                                                input_shape, 1))
        self._batch_tile = int(batch_tile)
        key = jax.random.PRNGKey(seed)
        self.heads = []
        for nunits in self.output_units:
            key, sub = jax.random.split(key)
            self.heads.append(init_mlp_params(sub, self.in_features, nunits))
        # nn.Parameter(torch.zeros(output_units[0]))  (kept 2-D: (1, nout))
        self.logstd = jnp.zeros((1, self.output_units[0]), jnp.float32)
        self._pack()

    def set_logstd(self, logstd):
        """Update logstd and refresh the cached exp(logstd) padding row."""
        self.logstd = jnp.asarray(logstd, jnp.float32).reshape(
            (1, self.output_units[0]))
        self._build_std_add()

    def _build_std_add(self):
        n0 = self.output_units[0]
        std_add = jnp.zeros((1, self._padded), jnp.float32)
        self._std_add = std_add.at[:, self._std_off:self._std_off + n0].set(
            jnp.exp(self.logstd))

    def _pack(self):
        """Pack per-head params into lane-dense fused slabs (weights in bf16)."""
        heads, nouts = self.heads, self.output_units
        nheads = len(heads)
        h64 = _HIDDEN * nheads

        offs, acc = [], 0
        for n in nouts:
            offs.append(acc)
            acc += n
        self._offs = tuple(offs)
        self._std_off = acc                       # std slot right after all heads
        total = acc + nouts[0]
        self._padded = max(128, ((total + 127) // 128) * 128)  # lane-dense output

        w1 = jnp.concatenate([h[0] for h in heads], axis=1)   # (F, H*64)
        b1 = jnp.concatenate([h[1] for h in heads], axis=1)   # (1, H*64)
        b2 = jnp.concatenate([h[3] for h in heads], axis=1)   # (1, H*64)
        w2 = jnp.zeros((h64, h64), jnp.float32)               # block-diagonal
        w3 = jnp.zeros((h64, self._padded), jnp.float32)
        b3 = jnp.zeros((1, self._padded), jnp.float32)
        for i, h in enumerate(heads):
            r0 = i * _HIDDEN
            w2 = w2.at[r0:r0 + _HIDDEN, r0:r0 + _HIDDEN].set(h[2])
            w3 = w3.at[r0:r0 + _HIDDEN, offs[i]:offs[i] + nouts[i]].set(h[4])
            b3 = b3.at[:, offs[i]:offs[i] + nouts[i]].set(h[5])
        # bf16 weights (MXU-native on v5e/v6e/v7x); f32 biases added to f32 acc.
        self._packed = (w1.astype(jnp.bfloat16), b1,
                        w2.astype(jnp.bfloat16), b2,
                        w3.astype(jnp.bfloat16), b3)
        self._build_std_add()

    def __call__(self, inputs):
        # broadcast_inputs(ndims=2): promote 1-D input to a batch of 1, then squeeze.
        expand = inputs.ndim == 1
        if expand:
            inputs = inputs[None]
        x = inputs.reshape((inputs.shape[0], -1)).astype(jnp.float32)

        slab = _fused_forward(x, self._packed, self._std_add,
                              batch_tile=self._batch_tile)

        n0 = self.output_units[0]
        head_outs = [slab[:, o:o + n].astype(jnp.float32)
                     for o, n in zip(self._offs, self.output_units)]
        logits = head_outs[0]
        std = slab[:, self._std_off:self._std_off + n0].astype(jnp.float32)
        outputs = (logits, std) + tuple(head_outs[1:])
        if expand:
            outputs = tuple(o.reshape(o.shape[1:]) for o in outputs)
        return outputs


# --------------------------------- main -------------------------------------


if __name__ == "__main__":
    # Typical actor-critic setup: observation dim 16, action dim 6, value head 1.
    input_shape = (16,)
    output_units = [6, 1]
    batch = 8

    model = MuJoCoModelPallas(input_shape, output_units, seed=0)

    key = jax.random.PRNGKey(0)
    x = jax.random.normal(key, (batch,) + input_shape, dtype=jnp.float32)

    logits, std, value = model(x)
    jax.block_until_ready((logits, std, value))

    # Pure-JAX f32 reference of the same math (kernel uses bf16 matmuls with
    # f32 accumulation, hence the relaxed tolerance).
    def ref_mlp(xin, p):
        w1, b1, w2, b2, w3, b3 = p
        h = jnp.tanh(xin @ w1 + b1)
        h = jnp.tanh(h @ w2 + b2)
        return h @ w3 + b3

    TOL = dict(atol=2e-2, rtol=2e-2)
    xf = x.reshape(batch, -1)
    ref_logits = ref_mlp(xf, model.heads[0])
    ref_std = jnp.broadcast_to(jnp.exp(model.logstd), (batch, output_units[0]))
    ref_value = ref_mlp(xf, model.heads[1])

    assert logits.shape == (batch, output_units[0])
    assert std.shape == (batch, output_units[0])
    assert value.shape == (batch, output_units[1])
    assert jnp.allclose(logits, ref_logits, **TOL)
    assert jnp.allclose(std, ref_std, atol=1e-6)
    assert jnp.allclose(value, ref_value, **TOL)

    # Exercise the batch-tiled (grid) path with a ragged last block:
    # 1040 = 1024 + 16 rows -> grid=(2,), second block is partially masked.
    big_batch = 1040
    xb = jax.random.normal(jax.random.PRNGKey(1), (big_batch,) + input_shape,
                           dtype=jnp.float32)
    blogits, bstd, bvalue = model(xb)
    jax.block_until_ready((blogits, bstd, bvalue))
    xbf = xb.reshape(big_batch, -1)
    assert blogits.shape == (big_batch, output_units[0])
    assert bstd.shape == (big_batch, output_units[0])
    assert bvalue.shape == (big_batch, output_units[1])
    assert jnp.allclose(blogits, ref_mlp(xbf, model.heads[0]), **TOL)
    assert jnp.allclose(bvalue, ref_mlp(xbf, model.heads[1]), **TOL)
    assert jnp.allclose(bstd, jnp.broadcast_to(jnp.exp(model.logstd),
                                               (big_batch, output_units[0])),
                        atol=1e-6)

    # 1-D input broadcast path (broadcast_inputs(ndims=2)).
    l1, s1, v1 = model(x[0])
    jax.block_until_ready((l1, s1, v1))
    assert l1.shape == (output_units[0],) and v1.shape == (output_units[1],)
    assert jnp.allclose(l1, ref_logits[0], **TOL)

    print("KERNEL_OK")
</pallas_src>

<mosaic_0001>
module attributes {stable_mosaic.version = 11 : i64} {
  func.func @_fused_mlp_kernel(%arg0: memref<8x16xf32, #tpu.memory_space<vmem>>, %arg1: memref<16x128xbf16, #tpu.memory_space<vmem>>, %arg2: memref<1x128xf32, #tpu.memory_space<vmem>>, %arg3: memref<128x128xbf16, #tpu.memory_space<vmem>>, %arg4: memref<1x128xf32, #tpu.memory_space<vmem>>, %arg5: memref<128x128xbf16, #tpu.memory_space<vmem>>, %arg6: memref<1x128xf32, #tpu.memory_space<vmem>>, %arg7: memref<1x128xf32, #tpu.memory_space<vmem>>, %arg8: memref<8x128xbf16, #tpu.memory_space<vmem>>) attributes {dimension_semantics = [], scalar_prefetch = 0 : i64, scratch_operands = 0 : i64, tpu.core_type = #tpu.core_type<tc>} {
    %c0 = arith.constant 0 : index
    %c0_0 = arith.constant 0 : index
    %0 = vector.load %arg0[%c0, %c0_0] : memref<8x16xf32, #tpu.memory_space<vmem>>, vector<8x16xf32>
    %1 = arith.truncf %0 : vector<8x16xf32> to vector<8x16xbf16>
    %c0_1 = arith.constant 0 : index
    %c0_2 = arith.constant 0 : index
    %2 = vector.load %arg1[%c0_1, %c0_2] : memref<16x128xbf16, #tpu.memory_space<vmem>>, vector<16x128xbf16>
    %cst = arith.constant dense<0.000000e+00> : vector<8x128xf32>
    %3 = tpu.matmul %1, %2, %cst {dimension_numbers = #tpu.dot_dimension_numbers<[1], [0], [0], [1], [0, 0, 1, 1], [], []>} : vector<8x16xbf16>, vector<16x128xbf16>, vector<8x128xf32> -> vector<8x128xf32>
    %c0_3 = arith.constant 0 : index
    %c0_4 = arith.constant 0 : index
    %4 = vector.load %arg2[%c0_3, %c0_4] : memref<1x128xf32, #tpu.memory_space<vmem>>, vector<1x128xf32>
    %5 = vector.broadcast %4 : vector<1x128xf32> to vector<8x128xf32>
    %6 = arith.addf %3, %5 : vector<8x128xf32>
    %7 = math.tanh %6 : vector<8x128xf32>
    %8 = arith.truncf %7 : vector<8x128xf32> to vector<8x128xbf16>
    %c0_5 = arith.constant 0 : index
    %c0_6 = arith.constant 0 : index
    %9 = vector.load %arg3[%c0_5, %c0_6] : memref<128x128xbf16, #tpu.memory_space<vmem>>, vector<128x128xbf16>
    %cst_7 = arith.constant dense<0.000000e+00> : vector<8x128xf32>
    %10 = tpu.matmul %8, %9, %cst_7 {dimension_numbers = #tpu.dot_dimension_numbers<[1], [0], [0], [1], [0, 0, 1, 1], [], []>} : vector<8x128xbf16>, vector<128x128xbf16>, vector<8x128xf32> -> vector<8x128xf32>
    %c0_8 = arith.constant 0 : index
    %c0_9 = arith.constant 0 : index
    %11 = vector.load %arg4[%c0_8, %c0_9] : memref<1x128xf32, #tpu.memory_space<vmem>>, vector<1x128xf32>
    %12 = vector.broadcast %11 : vector<1x128xf32> to vector<8x128xf32>
    %13 = arith.addf %10, %12 : vector<8x128xf32>
    %14 = math.tanh %13 : vector<8x128xf32>
    %15 = arith.truncf %14 : vector<8x128xf32> to vector<8x128xbf16>
    %c0_10 = arith.constant 0 : index
    %c0_11 = arith.constant 0 : index
    %16 = vector.load %arg5[%c0_10, %c0_11] : memref<128x128xbf16, #tpu.memory_space<vmem>>, vector<128x128xbf16>
    %cst_12 = arith.constant dense<0.000000e+00> : vector<8x128xf32>
    %17 = tpu.matmul %15, %16, %cst_12 {dimension_numbers = #tpu.dot_dimension_numbers<[1], [0], [0], [1], [0, 0, 1, 1], [], []>} : vector<8x128xbf16>, vector<128x128xbf16>, vector<8x128xf32> -> vector<8x128xf32>
    %c0_13 = arith.constant 0 : index
    %c0_14 = arith.constant 0 : index
    %18 = vector.load %arg6[%c0_13, %c0_14] : memref<1x128xf32, #tpu.memory_space<vmem>>, vector<1x128xf32>
    %19 = vector.broadcast %18 : vector<1x128xf32> to vector<8x128xf32>
    %20 = arith.addf %17, %19 : vector<8x128xf32>
    %c0_15 = arith.constant 0 : index
    %c0_16 = arith.constant 0 : index
    %21 = vector.load %arg7[%c0_15, %c0_16] : memref<1x128xf32, #tpu.memory_space<vmem>>, vector<1x128xf32>
    %22 = vector.broadcast %21 : vector<1x128xf32> to vector<8x128xf32>
    %23 = arith.addf %20, %22 : vector<8x128xf32>
    %24 = arith.truncf %23 : vector<8x128xf32> to vector<8x128xbf16>
    %c0_17 = arith.constant 0 : index
    %c0_18 = arith.constant 0 : index
    %25 = vector.load %arg8[%c0_17, %c0_18] : memref<8x128xbf16, #tpu.memory_space<vmem>>, vector<8x128xbf16>
    tpu.vector_store %arg8[%c0_17, %c0_18], %24 {strides = array<i32>} : memref<8x128xbf16, #tpu.memory_space<vmem>>, vector<8x128xbf16>,
    return
  }
}

</mosaic_0001>

<llo_original>
// kernel: tpu_custom_call.1
$region0: #{tpu_custom_call.1}
  #allocation0 [shape = 'u32[]', space=smem, size = 0x4, offset = 0x4, fixed_abs, tag = 'smem constant byte address 0x4 - core index']
  #allocation1 [shape = 'u32[72,128]{1,0:T(1,128)}', space=vmem, size = 0x9000, scoped, tag = 'internal scratch']
  %s0 = inlined_call_operand.hbm [shape: f32[8,16], index: 0, kind: input, shape index: {}]
  %s1 = inlined_call_operand.hbm [shape: bf16[16,128], index: 1, kind: input, shape index: {}]
  %s2 = inlined_call_operand.vmem [shape: f32[1,128], index: 2, kind: input, shape index: {}]
  %s3 = inlined_call_operand.hbm [shape: bf16[128,128], index: 3, kind: input, shape index: {}]
  %s4 = inlined_call_operand.vmem [shape: f32[1,128], index: 4, kind: input, shape index: {}]
  %s5 = inlined_call_operand.hbm [shape: bf16[128,128], index: 5, kind: input, shape index: {}]
  %s6 = inlined_call_operand.vmem [shape: f32[1,128], index: 6, kind: input, shape index: {}]
  %s7 = inlined_call_operand.vmem [shape: f32[1,128], index: 7, kind: input, shape index: {}]
  %s8 = inlined_call_operand.hbm [shape: bf16[8,128], index: 8, kind: output, shape index: {}]
  %s9 = sld [smem:[#allocation0]]
  $region58: #{tpu_custom_call.1} parent=0
    _
  %s11 = ssub.s32 1, %s9
  %s12 = scalar_select 0, %s11, %s9
  $region1: #{tpu_custom_call.1} parent=0
    #allocation2 [shape = 'u8[4096]{0}', space=vmem, size = 0x1000, scoped, tag = 'input window, operand 0, single buffered']
    #allocation3 [shape = 's32[1]{0}', space=sflag, size = 0x4, scoped, tag = 'scoped memory for tpu_custom_call.1']
    #allocation4 [shape = 's32[1]{0}', space=sflag, size = 0x4, scoped, tag = 'scoped memory for tpu_custom_call.1']
    #allocation5 [shape = 'u8[4096]{0}', space=vmem, size = 0x1000, scoped, tag = 'input window, operand 1, single buffered']
    #allocation6 [shape = 's32[1]{0}', space=sflag, size = 0x4, scoped, tag = 'scoped memory for tpu_custom_call.1']
    #allocation7 [shape = 'u8[32768]{0}', space=vmem, size = 0x8000, scoped, tag = 'input window, operand 3, single buffered']
    #allocation8 [shape = 'u8[32768]{0}', space=vmem, size = 0x8000, scoped, tag = 'input window, operand 5, single buffered']
    #allocation9 [shape = 's32[1]{0}', space=sflag, size = 0x4, scoped, tag = 'scoped memory for tpu_custom_call.1']
    #allocation10 [shape = 'u8[2048]{0}', space=vmem, size = 0x800, scoped, tag = 'output window, operand 0, single buffered']
    %13 = vsyncpa [#allocation3], 0
    %14 = vsyncpa [#allocation6], 0
    %15 = vsyncpa [#allocation9], 0
    %16 = vsyncpa [#allocation4], 0
    // Predicated region
    $region2: #{tpu_custom_call.1} parent=1 // pred_check
      _
    $region3: #{tpu_custom_call.1} parent=1 // pred_check_branch
      %18 = sbr.rel (0) target = $region5
    $region4: #{tpu_custom_call.1} parent=1 // pred_region
      %20 = vsyncadd [#allocation3], 0
      %s22 = sshll.u32 %s0, 4
      %s23 = int_to_ptr.hbm [resolvable:$true] %s22
      %s24 = sshll.u32 [#allocation2], 4
      %s25 = int_to_ptr.vmem [resolvable:$true] %s24
      %27 = dma.hbm_to_vmem [thread:$0]  %s23, 128, %s25, [#allocation3]
    $region5: #{tpu_custom_call.1} parent=1 // pred_fallthru
      _
    // Predicated region
    $region6: #{tpu_custom_call.1} parent=1 // pred_check
      _
    $region7: #{tpu_custom_call.1} parent=1 // pred_check_branch
      %29 = sbr.rel (0) target = $region9
    $region8: #{tpu_custom_call.1} parent=1 // pred_region
      %31 = vsyncadd [#allocation6], 0
      %s32 = sshll.u32 %s1, 4
      %s33 = int_to_ptr.hbm [resolvable:$true] %s32
      %s34 = sshll.u32 [#allocation5], 4
      %s35 = int_to_ptr.vmem [resolvable:$true] %s34
      %40 = dma.hbm_to_vmem [thread:$0]  %s33, 128, %s35, [#allocation6], 64, 64, 4
    $region9: #{tpu_custom_call.1} parent=1 // pred_fallthru
      _
    // Predicated region
    $region10: #{tpu_custom_call.1} parent=1 // pred_check
      _
    $region11: #{tpu_custom_call.1} parent=1 // pred_check_branch
      %42 = sbr.rel (0) target = $region13
    $region12: #{tpu_custom_call.1} parent=1 // pred_region
      _
    $region13: #{tpu_custom_call.1} parent=1 // pred_fallthru
      _
    // Predicated region
    $region14: #{tpu_custom_call.1} parent=1 // pred_check
      _
    $region15: #{tpu_custom_call.1} parent=1 // pred_check_branch
      %44 = sbr.rel (0) target = $region17
    $region16: #{tpu_custom_call.1} parent=1 // pred_region
      %46 = vsyncadd [#allocation6], 0
      %s47 = sshll.u32 %s3, 4
      %s48 = int_to_ptr.hbm [resolvable:$true] %s47
      %s49 = sshll.u32 [#allocation7], 4
      %s50 = int_to_ptr.vmem [resolvable:$true] %s49
      %55 = dma.hbm_to_vmem [thread:$0]  %s48, 1024, %s50, [#allocation6], 64, 64, 4
    $region17: #{tpu_custom_call.1} parent=1 // pred_fallthru
      _
    // Predicated region
    $region18: #{tpu_custom_call.1} parent=1 // pred_check
      _
    $region19: #{tpu_custom_call.1} parent=1 // pred_check_branch
      %57 = sbr.rel (0) target = $region21
    $region20: #{tpu_custom_call.1} parent=1 // pred_region
      _
    $region21: #{tpu_custom_call.1} parent=1 // pred_fallthru
      _
    // Predicated region
    $region22: #{tpu_custom_call.1} parent=1 // pred_check
      _
    $region23: #{tpu_custom_call.1} parent=1 // pred_check_branch
      %59 = sbr.rel (0) target = $region25
    $region24: #{tpu_custom_call.1} parent=1 // pred_region
      %61 = vsyncadd [#allocation9], 0
      %s62 = sshll.u32 %s5, 4
      %s63 = int_to_ptr.hbm [resolvable:$true] %s62
      %s64 = sshll.u32 [#allocation8], 4
      %s65 = int_to_ptr.vmem [resolvable:$true] %s64
      %70 = dma.hbm_to_vmem [thread:$0]  %s63, 1024, %s65, [#allocation9], 64, 64, 4
    $region25: #{tpu_custom_call.1} parent=1 // pred_fallthru
      _
    // Predicated region
    $region26: #{tpu_custom_call.1} parent=1 // pred_check
      _
    $region27: #{tpu_custom_call.1} parent=1 // pred_check_branch
      %72 = sbr.rel (0) target = $region29
    $region28: #{tpu_custom_call.1} parent=1 // pred_region
      _
    $region29: #{tpu_custom_call.1} parent=1 // pred_fallthru
      _
    // Predicated region
    $region30: #{tpu_custom_call.1} parent=1 // pred_check
      _
    $region31: #{tpu_custom_call.1} parent=1 // pred_check_branch
      %74 = sbr.rel (0) target = $region33
    $region32: #{tpu_custom_call.1} parent=1 // pred_region
      _
    $region33: #{tpu_custom_call.1} parent=1 // pred_fallthru
      _
    // Predicated region
    $region34: #{tpu_custom_call.1} parent=1 // pred_check
      _
    $region35: #{tpu_custom_call.1} parent=1 // pred_check_branch
      %76 = sbr.rel (0) target = $region37
    $region36: #{tpu_custom_call.1} parent=1 // pred_region
      %78 = dma.done [#allocation3], 128
    $region37: #{tpu_custom_call.1} parent=1 // pred_fallthru
      _
    // Predicated region
    $region38: #{tpu_custom_call.1} parent=1 // pred_check
      _
    $region39: #{tpu_custom_call.1} parent=1 // pred_check_branch
      %80 = sbr.rel (0) target = $region41
    $region40: #{tpu_custom_call.1} parent=1 // pred_region
      %82 = dma.done [#allocation6], 128
    $region41: #{tpu_custom_call.1} parent=1 // pred_fallthru
      _
    // Predicated region
    $region42: #{tpu_custom_call.1} parent=1 // pred_check
      _
    $region43: #{tpu_custom_call.1} parent=1 // pred_check_branch
      %84 = sbr.rel (0) target = $region45
    $region44: #{tpu_custom_call.1} parent=1 // pred_region
      %86 = dma.done [#allocation6], 1024
    $region45: #{tpu_custom_call.1} parent=1 // pred_fallthru
      _
    // Predicated region
    $region46: #{tpu_custom_call.1} parent=1 // pred_check
      _
    $region47: #{tpu_custom_call.1} parent=1 // pred_check_branch
      %88 = sbr.rel (0) target = $region49
    $region48: #{tpu_custom_call.1} parent=1 // pred_region
      %90 = dma.done [#allocation9], 1024
    $region49: #{tpu_custom_call.1} parent=1 // pred_fallthru
      _
    %v92 = vld [vmem:[#allocation2] sm:$0xff]
    %v93 = vpack.c.bf16 %v92, %v92
    %v94 = vld [vmem:[#allocation5] sm:$0xf]
    %v95 = vld [vmem:[#allocation5 + $0x4] sm:$0xf]
    %v96 = vld [vmem:[%s2] sm:$0x1]
    %v98 = vperm.slane %v96, 0
    %v102 = vunpack.c.l.b16 %v94
    %v103 = vunpack.c.l.b16 %v95
    %v104 = vpack.c.b16 %v103, %v102
    %vm106 = vcmask 130048
    %v108 = vsel %vm106, %v93, 0
    %110 = vmatpush.bf16.msra.mxu0 0
    %111 = vmatpush.bf16.msra.mxu0 0
    %112 = vmatpush.bf16.msra.mxu0 0
    %113 = vmatpush.bf16.msra.mxu0 0
    %114 = vmatpush.bf16.msra.mxu0 0
    %115 = vmatpush.bf16.msra.mxu0 0
    %116 = vmatpush.bf16.msra.mxu0 0
    %117 = vmatpush.bf16.msra.mxu0 %v104
    %118 = vmatmul.bf16.gmra.mxu0 %v108
    %v119 = vpop.f32.mrf.mxu0
    %v120 = vadd.f32 %v98, %v119
    %v121 = vpop.f32.mrf.mxu0
    %122 = vdwg.mxu0
    %v123 = vtanh.pop %v120
    %v124 = vpack.c.bf16 %v123, %v123
    %v125 = vld [vmem:[#allocation7] sm:$0xf]
    %v126 = vld [vmem:[#allocation7 + $0x4] sm:$0xf]
    %v127 = vld [vmem:[#allocation7 + $0x8] sm:$0xf]
    %v128 = vld [vmem:[#allocation7 + $0xc] sm:$0xf]
    %v129 = vld [vmem:[#allocation7 + $0x10] sm:$0xf]
    %v130 = vld [vmem:[#allocation7 + $0x14] sm:$0xf]
    %v131 = vld [vmem:[#allocation7 + $0x18] sm:$0xf]
    %v132 = vld [vmem:[#allocation7 + $0x1c] sm:$0xf]
    %v133 = vld [vmem:[#allocation7 + $0x20] sm:$0xf]
    %v134 = vld [vmem:[#allocation7 + $0x24] sm:$0xf]
    %v135 = vld [vmem:[#allocation7 + $0x28] sm:$0xf]
    %v136 = vld [vmem:[#allocation7 + $0x2c] sm:$0xf]
    %v137 = vld [vmem:[#allocation7 + $0x30] sm:$0xf]
    %v138 = vld [vmem:[#allocation7 + $0x34] sm:$0xf]
    %v139 = vld [vmem:[#allocation7 + $0x38] sm:$0xf]
    %v140 = vld [vmem:[#allocation7 + $0x3c] sm:$0xf]
    %v141 = vld [vmem:[%s4] sm:$0x1]
    %v143 = vperm.slane %v141, 0
    %v161 = vunpack.c.l.b16 %v125
    %v162 = vunpack.c.l.b16 %v126
    %v163 = vunpack.c.l.b16 %v127
    %v164 = vunpack.c.l.b16 %v128
    %v165 = vunpack.c.l.b16 %v129
    %v166 = vunpack.c.l.b16 %v130
    %v167 = vunpack.c.l.b16 %v131
    %v168 = vunpack.c.l.b16 %v132
    %v169 = vunpack.c.l.b16 %v133
    %v170 = vunpack.c.l.b16 %v134
    %v171 = vunpack.c.l.b16 %v135
    %v172 = vunpack.c.l.b16 %v136
    %v173 = vunpack.c.l.b16 %v137
    %v174 = vunpack.c.l.b16 %v138
    %v175 = vunpack.c.l.b16 %v139
    %v176 = vunpack.c.l.b16 %v140
    %v177 = vpack.c.b16 %v162, %v161
    %v178 = vpack.c.b16 %v164, %v163
    %v179 = vpack.c.b16 %v166, %v165
    %v180 = vpack.c.b16 %v168, %v167
    %v181 = vpack.c.b16 %v170, %v169
    %v182 = vpack.c.b16 %v172, %v171
    %v183 = vpack.c.b16 %v174, %v173
    %v184 = vpack.c.b16 %v176, %v175
    %193 = vmatpush.bf16.msra.mxu0 %v184
    %194 = vmatpush.bf16.msra.mxu0 %v183
    %195 = vmatpush.bf16.msra.mxu0 %v182
    %196 = vmatpush.bf16.msra.mxu0 %v181
    %197 = vmatpush.bf16.msra.mxu0 %v180
    %198 = vmatpush.bf16.msra.mxu0 %v179
    %199 = vmatpush.bf16.msra.mxu0 %v178
    %200 = vmatpush.bf16.msra.mxu0 %v177
    %201 = vmatmul.bf16.gmra.mxu0 %v124
    %v202 = vpop.f32.mrf.mxu0
    %v203 = vadd.f32 %v143, %v202
    %v204 = vpop.f32.mrf.mxu0
    %205 = vdwg.mxu0
    %v206 = vtanh.pop %v203
    %v207 = vpack.c.bf16 %v206, %v206
    %v208 = vld [vmem:[#allocation8] sm:$0xf]
    %v209 = vld [vmem:[#allocation8 + $0x4] sm:$0xf]
    %v210 = vld [vmem:[#allocation8 + $0x8] sm:$0xf]
    %v211 = vld [vmem:[#allocation8 + $0xc] sm:$0xf]
    %v212 = vld [vmem:[#allocation8 + $0x10] sm:$0xf]
    %v213 = vld [vmem:[#allocation8 + $0x14] sm:$0xf]
    %v214 = vld [vmem:[#allocation8 + $0x18] sm:$0xf]
    %v215 = vld [vmem:[#allocation8 + $0x1c] sm:$0xf]
    %v216 = vld [vmem:[#allocation8 + $0x20] sm:$0xf]
    %v217 = vld [vmem:[#allocation8 + $0x24] sm:$0xf]
    %v218 = vld [vmem:[#allocation8 + $0x28] sm:$0xf]
    %v219 = vld [vmem:[#allocation8 + $0x2c] sm:$0xf]
    %v220 = vld [vmem:[#allocation8 + $0x30] sm:$0xf]
    %v221 = vld [vmem:[#allocation8 + $0x34] sm:$0xf]
    %v222 = vld [vmem:[#allocation8 + $0x38] sm:$0xf]
    %v223 = vld [vmem:[#allocation8 + $0x3c] sm:$0xf]
    %v224 = vld [vmem:[%s6] sm:$0x1]
    %v226 = vperm.slane %v224, 0
    %v244 = vunpack.c.l.b16 %v208
    %v245 = vunpack.c.l.b16 %v209
    %v246 = vunpack.c.l.b16 %v210
    %v247 = vunpack.c.l.b16 %v211
    %v248 = vunpack.c.l.b16 %v212
    %v249 = vunpack.c.l.b16 %v213
    %v250 = vunpack.c.l.b16 %v214
    %v251 = vunpack.c.l.b16 %v215
    %v252 = vunpack.c.l.b16 %v216
    %v253 = vunpack.c.l.b16 %v217
    %v254 = vunpack.c.l.b16 %v218
    %v255 = vunpack.c.l.b16 %v219
    %v256 = vunpack.c.l.b16 %v220
    %v257 = vunpack.c.l.b16 %v221
    %v258 = vunpack.c.l.b16 %v222
    %v259 = vunpack.c.l.b16 %v223
    %v260 = vpack.c.b16 %v245, %v244
    %v261 = vpack.c.b16 %v247, %v246
    %v262 = vpack.c.b16 %v249, %v248
    %v263 = vpack.c.b16 %v251, %v250
    %v264 = vpack.c.b16 %v253, %v252
    %v265 = vpack.c.b16 %v255, %v254
    %v266 = vpack.c.b16 %v257, %v256
    %v267 = vpack.c.b16 %v259, %v258
    %276 = vmatpush.bf16.msra.mxu0 %v267
    %277 = vmatpush.bf16.msra.mxu0 %v266
    %278 = vmatpush.bf16.msra.mxu0 %v265
    %279 = vmatpush.bf16.msra.mxu0 %v264
    %280 = vmatpush.bf16.msra.mxu0 %v263
    %281 = vmatpush.bf16.msra.mxu0 %v262
    %282 = vmatpush.bf16.msra.mxu0 %v261
    %283 = vmatpush.bf16.msra.mxu0 %v260
    %284 = vmatmul.bf16.gmra.mxu0 %v207
    %v285 = vpop.f32.mrf.mxu0
    %v286 = vadd.f32 %v226, %v285
    %v287 = vpop.f32.mrf.mxu0
    %288 = vdwg.mxu0
    %v289 = vld [vmem:[%s7] sm:$0x1]
    %v291 = vperm.slane %v289, 0
    %v293 = vadd.f32 %v286, %v291
    %v294 = vpack.c.bf16 %v293, %v293
    %295 = vst [vmem:[#allocation10] sm:$0xf] %v294
    // Predicated region
    $region50: #{tpu_custom_call.1} parent=1 // pred_check
      _
    $region51: #{tpu_custom_call.1} parent=1 // pred_check_branch
      %297 = sbr.rel (0) target = $region53
    $region52: #{tpu_custom_call.1} parent=1 // pred_region
      %299 = vsyncadd [#allocation4], 0
      %s301 = sshll.u32 [#allocation10], 4
      %s302 = int_to_ptr.vmem [resolvable:$true] %s301
      %s303 = sshll.u32 %s8, 4
      %s304 = int_to_ptr.hbm [resolvable:$true] %s303
      %306 = dma.vmem_to_hbm [thread:$0]  %s302, 64, %s304, [#allocation4]
    $region53: #{tpu_custom_call.1} parent=1 // pred_fallthru
      _
    // Predicated region
    $region54: #{tpu_custom_call.1} parent=1 // pred_check
      _
    $region55: #{tpu_custom_call.1} parent=1 // pred_check_branch
      %308 = sbr.rel (0) target = $region57
    $region56: #{tpu_custom_call.1} parent=1 // pred_region
      %310 = dma.done [#allocation4], 64
    $region57: #{tpu_custom_call.1} parent=1 // pred_fallthru
      _
    %311 = vsyncpa [#allocation3], 1
    %312 = vsyncpa [#allocation6], 1
    %313 = vsyncpa [#allocation9], 1
    %314 = vsyncpa [#allocation4], 1

</llo_original>
